<compile_context>
chip_gen: v7x
topology: tpu7x:2x2x1
jax: 0.10.0
libtpu: 0.0.40
codegen_flags: <defaults>
</compile_context>

<pallas_src>
import functools

import jax
import jax.numpy as jnp
from jax import lax
from jax.experimental import pallas as pl
from jax.experimental.pallas import tpu as pltpu


def _locked_dropout_kernel(seed_ref, x_ref, o_ref, *, threshold: int, inv_keep: float):
    """Applies a (1, tile_BH) Bernoulli keep-mask (scaled by 1/keep) to a
    (tile_T, tile_BH) tile of x.  The mask is a pure function of
    (seed, absolute column index), so it is identical across every T tile
    -> locked over the T axis, and consistent across BH tiles."""
    _, tile_bh = x_ref.shape

    # Absolute per-(batch*hidden) column index; 2-D iota (TPU requires >= 2-D).
    col = (lax.broadcasted_iota(jnp.int32, (1, tile_bh), 1)
           + pl.program_id(1) * tile_bh).astype(jnp.uint32)
    seed = seed_ref[0].astype(jnp.uint32)

    # Stateless splitmix32-style hash: counter + seed -> well-mixed u32 bits.
    s = col * jnp.uint32(0x9E3779B1) + seed * jnp.uint32(0x85EBCA77) + jnp.uint32(1)
    s = s ^ (s >> 16)
    s = s * jnp.uint32(0x7FEB352D)
    s = s ^ (s >> 15)
    s = s * jnp.uint32(0x846CA68B)
    s = s ^ (s >> 16)
    # One extra mixing round to decorrelate adjacent (structured) column counters.
    s = s * jnp.uint32(0x9E3779B1)
    s = s ^ (s >> 16)

    # Integer-threshold Bernoulli(keep): keep iff bits < keep * 2^32.
    keep_mask = s < jnp.uint32(threshold)

    # Mask in the native dtype of x (0 or 1/keep); multiply without f32 upcast.
    inv = jnp.asarray(inv_keep, dtype=x_ref.dtype)
    mask = jnp.where(keep_mask, inv, jnp.zeros_like(inv))

    o_ref[...] = x_ref[...] * mask  # (tile_T, tile_BH) * (1, tile_BH) broadcast


def _sublane_rows(dtype) -> int:
    """Sublane packing granularity: 8 for 32-bit, 16 for bf16, 32 for int8/fp8."""
    return max(8, 32 // jnp.dtype(dtype).itemsize)


def _target_tile_bytes() -> int:
    """Generation-aware tile budget (mem-bound roofline vs ~0.35us/step overhead)."""
    try:
        kind = jax.devices()[0].device_kind.lower()
    except Exception:
        return 4 << 20
    if "v7" in kind:
        return 8 << 20
    if "v6" in kind:
        return 6 << 20
    if "v5e" in kind or ("v5" in kind and "lite" in kind):
        return 3 << 20
    return 4 << 20


def _choose_tiles(t: int, bh_pad: int, dtype, max_tile_rows=None):
    """Pick (tile_t, tile_bh). tile_bh is a multiple of 128 (or full BH); tile_t is
    a multiple of the dtype's sublane packing (or full T)."""
    itemsize = jnp.dtype(dtype).itemsize
    sub = _sublane_rows(dtype)
    target = _target_tile_bytes()

    # BH (lane) axis: only split when even a minimum-height slab overshoots budget.
    if bh_pad * sub * itemsize > target:
        tile_bh = max(128, ((target // (sub * itemsize)) // 128) * 128)
        tile_bh = min(tile_bh, bh_pad)
    else:
        tile_bh = bh_pad

    # T (sublane) axis: fill the budget, rounded to sublane packing.
    rows = max(sub, target // max(tile_bh * itemsize, 1))
    if max_tile_rows is not None:
        rows = min(rows, int(max_tile_rows))
    rows = min(rows, t)
    if rows < t:
        rows = max(sub, (rows // sub) * sub)
    else:
        rows = t

    # Keep >= 2 grid steps along T when T is big enough (v7x has 2 TensorCores;
    # a single giant tile would leave one idle).
    if rows >= t and tile_bh >= bh_pad and t >= 2 * sub:
        half = (t + 1) // 2
        rows = min(t, max(sub, ((half + sub - 1) // sub) * sub))

    return rows, tile_bh


def locked_dropout(x, *, dropout: float = 0.5, seed: int = 0, training: bool = True,
                   max_tile_rows=None, donate_input: bool = False):
    """JAX/Pallas equivalent of LockedDropout.forward(x, dropout).

    `seed` should be varied per training step by the caller (step counter or a
    value folded from a jax PRNG key) to get fresh masks each call.
    """
    if (not training) or (not dropout):
        return x

    keep = 1.0 - float(dropout)
    t, b, h = x.shape
    bh = b * h
    bh_pad = ((bh + 127) // 128) * 128  # lane-dense output (avoid masked stores)

    x2 = x.reshape(t, bh)
    if bh_pad != bh:
        x2 = jnp.pad(x2, ((0, 0), (0, bh_pad - bh)))

    tile_t, tile_bh = _choose_tiles(t, bh_pad, x.dtype, max_tile_rows)
    grid = (pl.cdiv(t, tile_t), pl.cdiv(bh_pad, tile_bh))

    itemsize = jnp.dtype(x.dtype).itemsize
    tile_bytes = tile_t * tile_bh * itemsize
    # Double-buffered input + output = 4x tile, plus margin; keep under v7x's 64 MiB.
    vmem_limit = int(min(max(32 << 20, 4 * tile_bytes + (4 << 20)), 60 << 20))

    threshold = min(int(keep * (1 << 32)), (1 << 32) - 1)
    kernel = functools.partial(
        _locked_dropout_kernel, threshold=threshold, inv_keep=1.0 / keep
    )
    seed_arr = jnp.asarray([seed], dtype=jnp.int32)

    out = pl.pallas_call(
        kernel,
        out_shape=jax.ShapeDtypeStruct((t, bh_pad), x.dtype),
        grid=grid,
        in_specs=[
            pl.BlockSpec(memory_space=pltpu.MemorySpace.SMEM),          # seed scalar
            pl.BlockSpec((tile_t, tile_bh), lambda i, j: (i, j)),       # x tile
        ],
        out_specs=pl.BlockSpec((tile_t, tile_bh), lambda i, j: (i, j)),  # y tile
        compiler_params=pltpu.CompilerParams(
            dimension_semantics=("parallel", "parallel"),
            vmem_limit_bytes=vmem_limit,
        ),
        cost_estimate=pl.CostEstimate(
            flops=t * bh_pad,
            transcendentals=0,
            bytes_accessed=2 * t * bh_pad * itemsize,
        ),
        input_output_aliases=({1: 0} if donate_input else {}),
    )(seed_arr, x2)

    if bh_pad != bh:
        out = out[:, :bh]
    return out.reshape(t, b, h)


def _check(x, y, dropout, rtol=1e-4):
    keep = 1.0 - dropout
    xf = x.astype(jnp.float32)
    yf = y.astype(jnp.float32)
    # 1) every output element is either 0 or x / keep
    ratio = jnp.where(xf != 0, yf / xf, 0.0)
    ok_values = bool(
        jnp.all(
            jnp.isclose(ratio, 0.0, atol=1e-5)
            | jnp.isclose(ratio, 1.0 / keep, rtol=1e-2, atol=rtol)
        )
    )
    # 2) the mask is "locked" across the T axis (same (B,H) pattern every step)
    zero_pattern = (yf == 0.0)
    ok_locked = bool(jnp.all(zero_pattern == zero_pattern[0:1]))
    return ok_values and ok_locked


if __name__ == "__main__":
    dropout = 0.5
    key = jax.random.PRNGKey(0)

    # Small shape consistent with the module: (seq=8, batch=2, hidden=32).
    # B*H = 64 -> exercises the pad-to-128-lanes path.
    T, B, H = 8, 2, 32
    x = jax.random.normal(key, (T, B, H), dtype=jnp.float32)
    y = jax.block_until_ready(locked_dropout(x, dropout=dropout, seed=1234, training=True))
    ok_small = _check(x, y, dropout)

    # Multi-tile run with T not divisible by the tile (forces several grid steps
    # plus a padded edge tile) to verify the mask stays locked across T tiles.
    T2 = 36
    x2 = jax.random.normal(jax.random.PRNGKey(1), (T2, B, H), dtype=jnp.float32)
    y2 = jax.block_until_ready(
        locked_dropout(x2, dropout=dropout, seed=7, training=True, max_tile_rows=8)
    )
    ok_tiled = _check(x2, y2, dropout)

    # bf16 path (16-row sublane packing, >=2 grid steps via the megacore split).
    T3, B3, H3 = 32, 2, 64
    x3 = jax.random.normal(jax.random.PRNGKey(2), (T3, B3, H3), dtype=jnp.bfloat16)
    y3 = jax.block_until_ready(locked_dropout(x3, dropout=dropout, seed=99, training=True))
    ok_bf16 = _check(x3, y3, dropout)

    # eval / no-dropout path is identity
    y_eval = jax.block_until_ready(locked_dropout(x, dropout=dropout, training=False))
    ok_eval = bool(jnp.all(y_eval == x))

    assert ok_small and ok_tiled and ok_bf16 and ok_eval
    print("KERNEL_OK")
</pallas_src>

<mosaic_0001>
module attributes {stable_mosaic.version = 11 : i64} {
  func.func @_locked_dropout_kernel(%arg0: i32, %arg1: i32, %arg2: memref<1xi32, #tpu.memory_space<smem>>, %arg3: memref<8x128xf32, #tpu.memory_space<vmem>>, %arg4: memref<8x128xf32, #tpu.memory_space<vmem>>) attributes {dimension_semantics = [#tpu.dimension_semantics<parallel>, #tpu.dimension_semantics<parallel>], iteration_bounds = array<i64: 1, 1>, scalar_prefetch = 0 : i64, scratch_operands = 0 : i64, tpu.core_type = #tpu.core_type<tc>, window_params = [{transform_indices = @transform_0, window_bounds = array<i64: 1>}, {transform_indices = @transform_1, window_bounds = array<i64: 8, 128>}, {transform_indices = @transform_2, window_bounds = array<i64: 8, 128>}]} {
    %0 = tpu.iota {dimensions = array<i32: 1>} : vector<1x128xi32>
    %c128_i32 = arith.constant 128 : i32
    %1 = arith.muli %arg1, %c128_i32 : i32
    %2 = vector.broadcast %1 : i32 to vector<1x128xi32>
    %3 = arith.addi %0, %2 : vector<1x128xi32>
    %c0 = arith.constant 0 : index
    %4 = memref.load %arg2[%c0] : memref<1xi32, #tpu.memory_space<smem>>
    %c-1640531535_i32 = arith.constant -1640531535 : i32
    %5 = vector.broadcast %c-1640531535_i32 : i32 to vector<1x128xi32>
    %6 = arith.muli %3, %5 : vector<1x128xi32>
    %c-2048144777_i32 = arith.constant -2048144777 : i32
    %7 = arith.muli %4, %c-2048144777_i32 : i32
    %8 = vector.broadcast %7 : i32 to vector<1x128xi32>
    %9 = arith.addi %6, %8 : vector<1x128xi32>
    %c1_i32 = arith.constant 1 : i32
    %10 = vector.broadcast %c1_i32 : i32 to vector<1x128xi32>
    %11 = arith.addi %9, %10 : vector<1x128xi32>
    %c16_i32 = arith.constant 16 : i32
    %12 = vector.broadcast %c16_i32 : i32 to vector<1x128xi32>
    %13 = arith.shrui %11, %12 : vector<1x128xi32>
    %14 = arith.xori %11, %13 : vector<1x128xi32>
    %c2146121005_i32 = arith.constant 2146121005 : i32
    %15 = vector.broadcast %c2146121005_i32 : i32 to vector<1x128xi32>
    %16 = arith.muli %14, %15 : vector<1x128xi32>
    %c15_i32 = arith.constant 15 : i32
    %17 = vector.broadcast %c15_i32 : i32 to vector<1x128xi32>
    %18 = arith.shrui %16, %17 : vector<1x128xi32>
    %19 = arith.xori %16, %18 : vector<1x128xi32>
    %c-2073254261_i32 = arith.constant -2073254261 : i32
    %20 = vector.broadcast %c-2073254261_i32 : i32 to vector<1x128xi32>
    %21 = arith.muli %19, %20 : vector<1x128xi32>
    %c16_i32_0 = arith.constant 16 : i32
    %22 = vector.broadcast %c16_i32_0 : i32 to vector<1x128xi32>
    %23 = arith.shrui %21, %22 : vector<1x128xi32>
    %24 = arith.xori %21, %23 : vector<1x128xi32>
    %c-1640531535_i32_1 = arith.constant -1640531535 : i32
    %25 = vector.broadcast %c-1640531535_i32_1 : i32 to vector<1x128xi32>
    %26 = arith.muli %24, %25 : vector<1x128xi32>
    %c16_i32_2 = arith.constant 16 : i32
    %27 = vector.broadcast %c16_i32_2 : i32 to vector<1x128xi32>
    %28 = arith.shrui %26, %27 : vector<1x128xi32>
    %29 = arith.xori %26, %28 : vector<1x128xi32>
    %c-2147483648_i32 = arith.constant -2147483648 : i32
    %30 = vector.broadcast %c-2147483648_i32 : i32 to vector<1x128xi32>
    %31 = arith.cmpi ult, %29, %30 : vector<1x128xi32>
    %cst = arith.constant 2.000000e+00 : f32
    %cst_3 = arith.constant 0.000000e+00 : f32
    %32 = vector.broadcast %cst : f32 to vector<1x128xf32>
    %33 = vector.broadcast %cst_3 : f32 to vector<1x128xf32>
    %34 = arith.select %31, %32, %33 : vector<1x128xi1>, vector<1x128xf32>
    %c0_4 = arith.constant 0 : index
    %c0_5 = arith.constant 0 : index
    %35 = vector.load %arg3[%c0_4, %c0_5] : memref<8x128xf32, #tpu.memory_space<vmem>>, vector<8x128xf32>
    %36 = vector.broadcast %34 : vector<1x128xf32> to vector<8x128xf32>
    %37 = arith.mulf %35, %36 : vector<8x128xf32>
    %c0_6 = arith.constant 0 : index
    %c0_7 = arith.constant 0 : index
    %38 = vector.load %arg4[%c0_6, %c0_7] : memref<8x128xf32, #tpu.memory_space<vmem>>, vector<8x128xf32>
    tpu.vector_store %arg4[%c0_6, %c0_7], %37 {strides = array<i32>} : memref<8x128xf32, #tpu.memory_space<vmem>>, vector<8x128xf32>,
    return
  }
  func.func @transform_0(%arg0: i32, %arg1: i32) -> i32 {
    %c0_i32 = arith.constant 0 : i32
    %c0_i32_0 = arith.constant 0 : i32
    return %c0_i32 : i32
  }
  func.func @transform_1(%arg0: i32, %arg1: i32) -> (i32, i32) {
    %c0_i32 = arith.constant 0 : i32
    return %arg0, %arg1 : i32, i32
  }
  func.func @transform_2(%arg0: i32, %arg1: i32) -> (i32, i32) {
    %c0_i32 = arith.constant 0 : i32
    return %arg0, %arg1 : i32, i32
  }
}

</mosaic_0001>

<llo_original>
// kernel: tpu_custom_call.1
$region0: #{tpu_custom_call.1}
  #allocation0 [shape = 'u32[]', space=smem, size = 0x4, offset = 0x4, fixed_abs, tag = 'smem constant byte address 0x4 - core index']
  #allocation1 [shape = 'u32[144,128]{1,0:T(1,128)}', space=vmem, size = 0x12000, scoped, tag = 'internal scratch']
  #allocation2 [shape = 's32[1]{0:T(128)S(6)}', space=smem, size = 0x200, scoped, tag = 'scoped memory for tpu_custom_call.1']
  %s0 = inlined_call_operand.<no memory space> [shape: s32[1], index: 0, kind: input, shape index: {}]
  %s1 = inlined_call_operand.hbm [shape: f32[8,128], index: 1, kind: input, shape index: {}]
  %s2 = inlined_call_operand.hbm [shape: f32[8,128], index: 2, kind: output, shape index: {}]
  %s3 = sld [smem:[#allocation0]]
  $region22: #{tpu_custom_call.1} parent=0
    _
  %s5 = ssub.s32 1, %s3
  %s6 = scalar_select 0, %s5, %s3
  %7 = sst [smem:[#allocation2]] %s0
  $region1: #{tpu_custom_call.1} parent=0
    #allocation3 [shape = 'u8[4096]{0}', space=vmem, size = 0x1000, scoped, tag = 'input window, operand 1, single buffered']
    #allocation4 [shape = 's32[1]{0}', space=sflag, size = 0x4, scoped, tag = 'scoped memory for tpu_custom_call.1']
    #allocation5 [shape = 's32[1]{0}', space=sflag, size = 0x4, scoped, tag = 'scoped memory for tpu_custom_call.1']
    #allocation6 [shape = 'u8[4096]{0}', space=vmem, size = 0x1000, scoped, tag = 'output window, operand 0, single buffered']
    %8 = vsyncpa [#allocation4], 0
    %9 = vsyncpa [#allocation5], 0
    // Predicated region
    $region2: #{tpu_custom_call.1} parent=1 // pred_check
      _
    $region3: #{tpu_custom_call.1} parent=1 // pred_check_branch
      %11 = sbr.rel (0) target = $region5
    $region4: #{tpu_custom_call.1} parent=1 // pred_region
      _
    $region5: #{tpu_custom_call.1} parent=1 // pred_fallthru
      _
    // Predicated region
    $region6: #{tpu_custom_call.1} parent=1 // pred_check
      _
    $region7: #{tpu_custom_call.1} parent=1 // pred_check_branch
      %13 = sbr.rel (0) target = $region9
    $region8: #{tpu_custom_call.1} parent=1 // pred_region
      %s15 = ssub.s32 128, 128
      %16 = vsyncadd [#allocation4], %s15
      %s18 = sshll.u32 [#allocation3], 4
      %s19 = int_to_ptr.vmem [resolvable:$true] %s18
      %21 = dma.hbm_to_vmem [thread:$0]  %s1, 128, %s19, [#allocation4]
    $region9: #{tpu_custom_call.1} parent=1 // pred_fallthru
      _
    // Predicated region
    $region10: #{tpu_custom_call.1} parent=1 // pred_check
      _
    $region11: #{tpu_custom_call.1} parent=1 // pred_check_branch
      %23 = sbr.rel (0) target = $region13
    $region12: #{tpu_custom_call.1} parent=1 // pred_region
      %24 = dma.done [#allocation4], 128
    $region13: #{tpu_custom_call.1} parent=1 // pred_fallthru
      _
    %v25 = vlaneseq
    %v26 = vand.u32 %v25, 127
    %s27 = smul.u32 0, 128
    %v28 = vstv %s27
    %v29 = vadd.s32 %v26, %v28
    %s30 = sld [smem:[#allocation2]]
    %v31 = vmul.u32 %v29, 2654435761
    %s32 = smul.u32 %s30, 2246822519
    %v33 = vstv %s32
    %v34 = vadd.s32 %v31, %v33
    %v35 = vadd.s32 %v34, 1
    %v36 = vshrl.u32 %v35, 16
    %v37 = vxor.u32 %v35, %v36
    %v38 = vmul.u32 %v37, 2146121005
    %v39 = vshrl.u32 %v38, 15
    %v40 = vxor.u32 %v38, %v39
    %v41 = vmul.u32 %v40, 2221713035
    %v42 = vshrl.u32 %v41, 16
    %v43 = vxor.u32 %v41, %v42
    %v44 = vmul.u32 %v43, 2654435761
    %v45 = vshrl.u32 %v44, 16
    %v46 = vxor.u32 %v44, %v45
    %vm47 = vcmp.lt.u32.totalorder %v46, 2147483648
    %v48 = vsel %vm47, 2.0, 0.0
    %v49 = vld [vmem:[#allocation3] sm:$0xff]
    %v50 = vmul.f32 %v49, %v48
    %51 = vst [vmem:[#allocation6] sm:$0xff] %v50
    // Predicated region
    $region14: #{tpu_custom_call.1} parent=1 // pred_check
      _
    $region15: #{tpu_custom_call.1} parent=1 // pred_check_branch
      %53 = sbr.rel (0) target = $region17
    $region16: #{tpu_custom_call.1} parent=1 // pred_region
      %s55 = ssub.s32 128, 128
      %56 = vsyncadd [#allocation5], %s55
      %s58 = sshll.u32 [#allocation6], 4
      %s59 = int_to_ptr.vmem [resolvable:$true] %s58
      %61 = dma.vmem_to_hbm [thread:$0]  %s59, 128, %s2, [#allocation5]
    $region17: #{tpu_custom_call.1} parent=1 // pred_fallthru
      _
    // Predicated region
    $region18: #{tpu_custom_call.1} parent=1 // pred_check
      _
    $region19: #{tpu_custom_call.1} parent=1 // pred_check_branch
      %63 = sbr.rel (0) target = $region21
    $region20: #{tpu_custom_call.1} parent=1 // pred_region
      %64 = dma.done [#allocation5], 128
    $region21: #{tpu_custom_call.1} parent=1 // pred_fallthru
      _
    %65 = vsyncpa [#allocation4], 1
    %66 = vsyncpa [#allocation5], 1

</llo_original>
